<compile_context>
chip_gen: v7x
topology: tpu7x:2x2x1
jax: 0.10.0
libtpu: 0.0.40
codegen_flags: <defaults>
</compile_context>

<pallas_src>
import functools

import jax
import jax.numpy as jnp
import numpy as np
from jax.experimental import pallas as pl
from jax.experimental.pallas import tpu as pltpu


# ----------------------------- Pallas kernel --------------------------------
def rms_layernorm_kernel(x_ref, c_ref, o_ref, *, eps):
    """One row-tile of RMSLayerNorm.

    c_ref rows (each (1, D), f32):
      0: meanw = mask / C_0   (mean weights, nonzero only on the l=0 block)
      1: mask                 (1.0 on the l=0 block, else 0.0)
      2: bfac                 (balance factor 1/((2l+1)*counts[c]*max_dim))
      3: affine weight        (per-channel weight repeated per m)
      4: bias                 (l=0 block only, else 0.0)
      5..7: zero padding (sublane alignment)
    """
    x = x_ref[...].astype(jnp.float32)          # (tm, D)
    c = c_ref[...]                              # (8, D)
    meanw = c[0:1]
    mask = c[1:2]
    bfac = c[2:3]
    w = c[3:4]
    bias = c[4:5]

    # mean of the l=0 block (1/C_0 folded into meanw host-side)
    mean = jnp.sum(x * meanw, axis=1, keepdims=True)        # (tm, 1)
    feat = x - mean * mask                                   # center l=0 block
    # balanced RMS norm; feat^2 * bfac >= 0, so no negative-norm hazard
    norm = jnp.sum(feat * feat * bfac, axis=1, keepdims=True)
    inv = jax.lax.rsqrt(norm + eps)

    o_ref[...] = (feat * (inv * w) + bias).astype(o_ref.dtype)


def rms_layernorm(x, consts, *, eps, block_rows=None):
    """Apply RMSLayerNorm. x: (N, D); consts: (8, D) packed constants."""
    N, D = x.shape
    # sublane packing: 8 rows per sublane-tile for f32, 16 for 16-bit dtypes
    sub = 8 if x.dtype == jnp.float32 else 16
    if block_rows is None:
        block_rows = 8192 if x.dtype == jnp.float32 else 16384

    # Clamp the tile so the grid keeps >= ~4 blocks (keeps both v7x
    # TensorCores busy on moderate N); always a multiple of the sublane pack.
    quarter = -(-N // 4)                       # cdiv(N, 4)
    quarter = -(-quarter // sub) * sub         # round up to sublane multiple
    br = max(sub, min(int(block_rows), quarter))
    n_blocks = pl.cdiv(N, br)                  # ragged last block is fine:
                                               # boundary writes are masked

    kernel = functools.partial(rms_layernorm_kernel, eps=float(eps))
    return pl.pallas_call(
        kernel,
        out_shape=jax.ShapeDtypeStruct((N, D), x.dtype),
        grid_spec=pltpu.PrefetchScalarGridSpec(
            num_scalar_prefetch=0,
            grid=(n_blocks,),
            in_specs=[
                pl.BlockSpec((br, D), lambda i: (i, 0)),
                pl.BlockSpec((8, D), lambda i: (0, 0)),   # constants, resident
            ],
            out_specs=pl.BlockSpec((br, D), lambda i: (i, 0)),
        ),
        compiler_params=pltpu.CompilerParams(
            dimension_semantics=("parallel",),
            vmem_limit_bytes=48 * 1024 * 1024),
    )(x, consts)


# ------------------------- host-side parameter glue --------------------------
def build_flat_params(weights_per_l, bias, channels):
    """Pack per-irrep constants into one (8, D) f32 array."""
    lmax = len(channels) - 1
    max_dim = max(channels)
    c0 = channels[0]
    counts = np.zeros(max_dim, np.float32)             # balance_channel_weight
    for l in range(lmax + 1):
        counts[:channels[l]] += 1.0

    bfac, wflat, mask, biasf = [], [], [], []
    for l in range(lmax + 1):
        deg = 2 * l + 1
        w_l = np.asarray(weights_per_l[l], np.float32)
        for c in range(channels[l]):
            for _m in range(deg):
                bfac.append(1.0 / (deg * counts[c] * max_dim))
                wflat.append(float(w_l[c]))
                mask.append(1.0 if l == 0 else 0.0)
                biasf.append(float(bias[c]) if l == 0 else 0.0)

    bfac = np.asarray(bfac, np.float32)
    wflat = np.asarray(wflat, np.float32)
    mask = np.asarray(mask, np.float32)
    biasf = np.asarray(biasf, np.float32)
    meanw = mask / float(c0)

    D = bfac.shape[0]
    consts = np.zeros((8, D), np.float32)
    consts[0] = meanw
    consts[1] = mask
    consts[2] = bfac
    consts[3] = wflat
    consts[4] = biasf
    return jnp.asarray(consts)


# ------------------------- pure-JAX reference (torch port) -------------------
def reference(x, weights_per_l, bias, channels, eps):
    lmax = len(channels) - 1
    max_dim = max(channels)
    dims = [(2 * l + 1) * channels[l] for l in range(lmax + 1)]
    slices = np.cumsum([0] + dims)

    f0 = x[:, slices[0]:slices[1]]
    f0 = f0 - f0.mean(axis=1, keepdims=True)
    feature = jnp.concatenate([f0, x[:, slices[1]:]], axis=1) if lmax > 0 else f0

    w_list = []
    for l, w in enumerate(weights_per_l):
        w_list.append(jnp.repeat(w[:, None], 2 * l + 1, axis=1).reshape(1, -1))
    weights = jnp.concatenate(w_list, axis=1)

    feats = []
    for l in range(lmax + 1):
        fl = feature[:, slices[l]:slices[l + 1]]
        fl = fl.reshape(-1, channels[l], 2 * l + 1).transpose(0, 2, 1)
        fl = jnp.pad(fl, ((0, 0), (0, 0), (0, max_dim - channels[l])))
        feats.append(fl)
    feat_list = jnp.concatenate(feats, axis=1)

    bdw = np.zeros(((lmax + 1) ** 2, 1), np.float32)
    bcw = np.zeros((max_dim, 1), np.float32)
    for l in range(lmax + 1):
        bdw[l * l:l * l + 2 * l + 1] = 1.0 / (2 * l + 1)
        bcw[:channels[l]] += 1.0
    bw = jnp.asarray(bdw @ (1.0 / bcw).T)

    fn = (feat_list ** 2 * bw[None]).sum(axis=1, keepdims=True)
    fn = fn.mean(axis=2)
    fn = (fn + eps) ** -0.5
    feature = feature * fn * weights
    feature = feature.at[:, slices[0]:slices[1]].add(bias[None, :])
    return feature


# ----------------------------------- main ------------------------------------
if __name__ == "__main__":
    # irreps "16x0e + 8x1o + 4x2e"  -> lmax=2, channels=[16, 8, 4], D=60
    channels = [16, 8, 4]
    lmax = len(channels) - 1
    D = sum((2 * l + 1) * channels[l] for l in range(lmax + 1))
    N = 20          # not a multiple of 8 -> exercises the ragged last block
    eps = 1e-12

    key = jax.random.PRNGKey(0)
    kx, kw0, kw1, kw2, kb = jax.random.split(key, 5)
    x = jax.random.normal(kx, (N, D), dtype=jnp.float32)

    # deterministic synthetic affine params (module init is ones/zeros; use
    # random deterministic values so the affine path is actually exercised)
    weights_per_l = [
        1.0 + 0.1 * jax.random.normal(kw0, (channels[0],), jnp.float32),
        1.0 + 0.1 * jax.random.normal(kw1, (channels[1],), jnp.float32),
        1.0 + 0.1 * jax.random.normal(kw2, (channels[2],), jnp.float32),
    ]
    bias = 0.1 * jax.random.normal(kb, (channels[0],), jnp.float32)

    consts = build_flat_params(weights_per_l, np.asarray(bias), channels)

    out = rms_layernorm(x, consts, eps=eps)
    out = jax.block_until_ready(out)

    ref = reference(x, weights_per_l, bias, channels, eps)
    np.testing.assert_allclose(np.asarray(out), np.asarray(ref),
                               rtol=1e-5, atol=1e-5)
    print("KERNEL_OK")
</pallas_src>

<mosaic_0001>
module attributes {stable_mosaic.version = 11 : i64} {
  func.func @rms_layernorm_kernel(%arg0: i32, %arg1: memref<8x60xf32, #tpu.memory_space<vmem>>, %arg2: memref<8x60xf32, #tpu.memory_space<vmem>>, %arg3: memref<8x60xf32, #tpu.memory_space<vmem>>) attributes {dimension_semantics = [#tpu.dimension_semantics<parallel>], iteration_bounds = array<i64: 3>, scalar_prefetch = 0 : i64, scratch_operands = 0 : i64, tpu.core_type = #tpu.core_type<tc>, window_params = [{transform_indices = @transform_0, window_bounds = array<i64: 8, 60>}, {pipeline_mode = #tpu.pipeline_mode<synchronous>, transform_indices = @transform_1, window_bounds = array<i64: 8, 60>}, {transform_indices = @transform_2, window_bounds = array<i64: 8, 60>}]} {
    %c0 = arith.constant 0 : index
    %c0_0 = arith.constant 0 : index
    %0 = vector.load %arg1[%c0, %c0_0] : memref<8x60xf32, #tpu.memory_space<vmem>>, vector<8x60xf32>
    %c0_1 = arith.constant 0 : index
    %c0_2 = arith.constant 0 : index
    %1 = vector.load %arg2[%c0_1, %c0_2] : memref<8x60xf32, #tpu.memory_space<vmem>>, vector<8x60xf32>
    %2 = vector.extract_strided_slice %1 {offsets = [0, 0], sizes = [1, 60], strides = [1, 1]} : vector<8x60xf32> to vector<1x60xf32>
    %3 = vector.extract_strided_slice %1 {offsets = [1, 0], sizes = [1, 60], strides = [1, 1]} : vector<8x60xf32> to vector<1x60xf32>
    %4 = vector.extract_strided_slice %1 {offsets = [2, 0], sizes = [1, 60], strides = [1, 1]} : vector<8x60xf32> to vector<1x60xf32>
    %5 = vector.extract_strided_slice %1 {offsets = [3, 0], sizes = [1, 60], strides = [1, 1]} : vector<8x60xf32> to vector<1x60xf32>
    %6 = vector.extract_strided_slice %1 {offsets = [4, 0], sizes = [1, 60], strides = [1, 1]} : vector<8x60xf32> to vector<1x60xf32>
    %7 = vector.broadcast %2 : vector<1x60xf32> to vector<8x60xf32>
    %8 = arith.mulf %0, %7 : vector<8x60xf32>
    %cst = arith.constant dense<0.000000e+00> : vector<8xf32>
    %9 = vector.multi_reduction <add>, %8, %cst [1] : vector<8x60xf32> to vector<8xf32>
    %10 = vector.shape_cast %9 : vector<8xf32> to vector<8x1xf32>
    %11 = vector.broadcast %10 : vector<8x1xf32> to vector<8x60xf32>
    %12 = vector.broadcast %3 : vector<1x60xf32> to vector<8x60xf32>
    %13 = arith.mulf %11, %12 : vector<8x60xf32>
    %14 = arith.subf %0, %13 : vector<8x60xf32>
    %15 = arith.mulf %14, %14 : vector<8x60xf32>
    %16 = vector.broadcast %4 : vector<1x60xf32> to vector<8x60xf32>
    %17 = arith.mulf %15, %16 : vector<8x60xf32>
    %cst_3 = arith.constant dense<0.000000e+00> : vector<8xf32>
    %18 = vector.multi_reduction <add>, %17, %cst_3 [1] : vector<8x60xf32> to vector<8xf32>
    %19 = vector.shape_cast %18 : vector<8xf32> to vector<8x1xf32>
    %cst_4 = arith.constant 9.99999996E-13 : f32
    %20 = vector.broadcast %cst_4 : f32 to vector<8x1xf32>
    %21 = arith.addf %19, %20 : vector<8x1xf32>
    %22 = math.rsqrt %21 : vector<8x1xf32>
    %23 = vector.broadcast %22 : vector<8x1xf32> to vector<8x60xf32>
    %24 = vector.broadcast %5 : vector<1x60xf32> to vector<8x60xf32>
    %25 = arith.mulf %23, %24 : vector<8x60xf32>
    %26 = arith.mulf %14, %25 : vector<8x60xf32>
    %27 = vector.broadcast %6 : vector<1x60xf32> to vector<8x60xf32>
    %28 = arith.addf %26, %27 : vector<8x60xf32>
    %c0_5 = arith.constant 0 : index
    %c0_6 = arith.constant 0 : index
    %29 = vector.load %arg3[%c0_5, %c0_6] : memref<8x60xf32, #tpu.memory_space<vmem>>, vector<8x60xf32>
    tpu.vector_store %arg3[%c0_5, %c0_6], %28 {strides = array<i32>} : memref<8x60xf32, #tpu.memory_space<vmem>>, vector<8x60xf32>,
    return
  }
  func.func @transform_0(%arg0: i32) -> (i32, i32) {
    %c0_i32 = arith.constant 0 : i32
    %c0_i32_0 = arith.constant 0 : i32
    return %arg0, %c0_i32 : i32, i32
  }
  func.func @transform_1(%arg0: i32) -> (i32, i32) {
    %c0_i32 = arith.constant 0 : i32
    %c0_i32_0 = arith.constant 0 : i32
    %c0_i32_1 = arith.constant 0 : i32
    return %c0_i32, %c0_i32_0 : i32, i32
  }
  func.func @transform_2(%arg0: i32) -> (i32, i32) {
    %c0_i32 = arith.constant 0 : i32
    %c0_i32_0 = arith.constant 0 : i32
    return %arg0, %c0_i32 : i32, i32
  }
}

</mosaic_0001>

<llo_original>
// kernel: tpu_custom_call.1
$region0: #{tpu_custom_call.1}
  #allocation0 [shape = 'u32[]', space=smem, size = 0x4, offset = 0x4, fixed_abs, tag = 'smem constant byte address 0x4 - core index']
  #allocation1 [shape = 'u32[144,128]{1,0:T(1,128)}', space=vmem, size = 0x12000, scoped, tag = 'internal scratch']
  %s0 = inlined_call_operand.hbm [shape: f32[20,60], index: 0, kind: input, shape index: {}]
  %s1 = inlined_call_operand.hbm [shape: f32[8,60], index: 1, kind: input, shape index: {}]
  %s2 = inlined_call_operand.hbm [shape: f32[20,60], index: 2, kind: output, shape index: {}]
  %s3 = sld [smem:[#allocation0]]
  $region49: #{tpu_custom_call.1} parent=0
    _
  %s5 = ssub.s32 1, %s3
  %s6 = scalar_select 0, %s5, %s3
  $region1: #{tpu_custom_call.1} parent=0
    #allocation2 [shape = 'u8[8192]{0}', space=vmem, size = 0x2000, scoped, tag = 'input window, operand 0']
    #allocation3 [shape = 's32[2]{0}', space=sflag, size = 0x8, scoped, tag = 'scoped memory for tpu_custom_call.1']
    #allocation4 [shape = 's32[2]{0}', space=sflag, size = 0x8, scoped, tag = 'scoped memory for tpu_custom_call.1']
    #allocation5 [shape = 'u8[4096]{0}', space=vmem, size = 0x1000, scoped, tag = 'input window, operand 1, single buffered']
    #allocation6 [shape = 's32[1]{0}', space=sflag, size = 0x4, scoped, tag = 'scoped memory for tpu_custom_call.1']
    #allocation7 [shape = 'u8[8192]{0}', space=vmem, size = 0x2000, scoped, tag = 'output window, operand 0']
    %7 = vsyncpa [#allocation3], 0
    %s8 = scalar_lea.sflag [#allocation3], 1
    %9 = vsyncpa %s8, 0
    %10 = vsyncpa [#allocation6], 0
    %11 = vsyncpa [#allocation4], 0
    %s12 = scalar_lea.sflag [#allocation4], 1
    %13 = vsyncpa %s12, 0
    loop: start=0, step=1, limit=5
    $region2: #{tpu_custom_call.1} parent=1 // loop_pre_header
      _
    $region3: #{tpu_custom_call.1} parent=1 // loop_header
      %s15 = sphi 0, %s19
      %p16 = scmp.ge.s32.totalorder %s15, 5
      %s25 = sphi 0, %s27
      %s28 = sphi 0, %s25
      %s29 = sphi 0, %s28
      %s45 = sphi 0, %s29
      %s49 = sphi 0, %s49
      %s51 = sphi 0, %s49
      %s52 = sphi 0, %s51
      %s66 = sphi 0, %s52
      %s72 = sphi 0, %s74
      %s75 = sphi 0, %s72
      %s76 = sphi 0, %s75
      %s92 = sphi 0, %s76
    $region4: #{tpu_custom_call.1} parent=1 // loop_header_branch
      %18 = sbr.rel (%p16) target = $region8
    $region5: #{tpu_custom_call.1} parent=1 // loop_body
      %s20 = ssub.s32 %s15, 1
      %s21 = ssub.s32 %s15, 2
      %s22 = sadd.s32 %s15, 1
      %s23 = ssub.s32 %s15, %s22
      %p24 = scmp.eq.s32.totalorder %s23, 0
      %s26 = sadd.s32 %s25, 1
      %s27 = scalar_select %p24, %s25, %s26
      %p30 = pneg %p24
      %p31 = scmp.eq.s32.totalorder %s15, 2
      %p32 = por %p30, %p31
      %p33 = scmp.ne.s32.totalorder %s25, %s28
      %p34 = scmp.eq.s32.totalorder %s15, 0
      %p35 = por %p33, %p34
      %p36 = scmp.ne.s32.totalorder %s25, %s28
      %p37 = scmp.eq.s32.totalorder %s20, 2
      %p38 = por %p36, %p37
      %p39 = scmp.ne.s32.totalorder %s28, %s29
      %p40 = scmp.eq.s32.totalorder %s20, 0
      %p41 = por %p39, %p40
      %p42 = scmp.ne.s32.totalorder %s28, %s29
      %p43 = scmp.eq.s32.totalorder %s21, 2
      %p44 = por %p42, %p43
      %p46 = scmp.ne.s32.totalorder %s29, %s45
      %p47 = scmp.eq.s32.totalorder %s21, 0
      %p48 = por %p46, %p47
      %s50 = sadd.s32 %s49, 1
      %p53 = scmp.eq.s32.totalorder %s15, 2
      %p54 = scmp.ne.s32.totalorder %s49, %s51
      %p55 = scmp.eq.s32.totalorder %s15, 0
      %p56 = por %p54, %p55
      %p57 = scmp.ne.s32.totalorder %s49, %s51
      %p58 = scmp.eq.s32.totalorder %s20, 2
      %p59 = por %p57, %p58
      %p60 = scmp.ne.s32.totalorder %s51, %s52
      %p61 = scmp.eq.s32.totalorder %s20, 0
      %p62 = por %p60, %p61
      %p63 = scmp.ne.s32.totalorder %s51, %s52
      %p64 = scmp.eq.s32.totalorder %s21, 2
      %p65 = por %p63, %p64
      %p67 = scmp.ne.s32.totalorder %s52, %s66
      %p68 = scmp.eq.s32.totalorder %s21, 0
      %p69 = por %p67, %p68
      %s70 = ssub.s32 %s15, %s22
      %p71 = scmp.eq.s32.totalorder %s70, 0
      %s73 = sadd.s32 %s72, 1
      %s74 = scalar_select %p71, %s72, %s73
      %p77 = pneg %p71
      %p78 = scmp.eq.s32.totalorder %s15, 2
      %p79 = por %p77, %p78
      %p80 = scmp.ne.s32.totalorder %s72, %s75
      %p81 = scmp.eq.s32.totalorder %s15, 0
      %p82 = por %p80, %p81
      %p83 = scmp.ne.s32.totalorder %s72, %s75
      %p84 = scmp.eq.s32.totalorder %s20, 2
      %p85 = por %p83, %p84
      %p86 = scmp.ne.s32.totalorder %s75, %s76
      %p87 = scmp.eq.s32.totalorder %s20, 0
      %p88 = por %p86, %p87
      %p89 = scmp.ne.s32.totalorder %s75, %s76
      %p90 = scmp.eq.s32.totalorder %s21, 2
      %p91 = por %p89, %p90
      %p93 = scmp.ne.s32.totalorder %s76, %s92
      %p94 = scmp.eq.s32.totalorder %s21, 0
      %p95 = por %p93, %p94
      %p96 = scmp.le.s32.totalorder 1, %s15
      %p97 = scmp.lt.s32.totalorder %s15, 4
      %p98 = pnand %p96, %p97
      %p99 = pneg %p98
      // Predicated region
      $region9: #{tpu_custom_call.1} parent=5 // pred_check
        _
      $region10: #{tpu_custom_call.1} parent=5 // pred_check_branch
        %101 = sbr.rel (%p98) target = $region12
      $region11: #{tpu_custom_call.1} parent=5 // pred_region
        %s102 = ssub.s32 %s15, 1
        // Predicated region
        $region13: #{tpu_custom_call.1} parent=11 // pred_check
          %p103 = pneg %p62
        $region14: #{tpu_custom_call.1} parent=11 // pred_check_branch
          %105 = sbr.rel (%p103) target = $region16
        $region15: #{tpu_custom_call.1} parent=11 // pred_region
          %s107 = ssub.s32 128, 128
          %108 = vsyncadd [#allocation6], %s107
          %s110 = sshll.u32 [#allocation5], 4
          %s111 = int_to_ptr.vmem [resolvable:$true] %s110
          %113 = dma.hbm_to_vmem [thread:$0]  %s1, 128, %s111, [#allocation6]
        $region16: #{tpu_custom_call.1} parent=11 // pred_fallthru
          _
      $region12: #{tpu_custom_call.1} parent=5 // pred_fallthru
        _
      %p114 = scmp.lt.s32.totalorder %s15, 3
      // Predicated region
      $region17: #{tpu_custom_call.1} parent=5 // pred_check
        %p115 = pneg %p114
      $region18: #{tpu_custom_call.1} parent=5 // pred_check_branch
        %117 = sbr.rel (%p115) target = $region20
      $region19: #{tpu_custom_call.1} parent=5 // pred_region
        // Predicated region
        $region21: #{tpu_custom_call.1} parent=19 // pred_check
          %p118 = pneg %p35
        $region22: #{tpu_custom_call.1} parent=19 // pred_check_branch
          %120 = sbr.rel (%p118) target = $region24
        $region23: #{tpu_custom_call.1} parent=19 // pred_region
          %s121 = sand.u32 %s25, 1
          %s122 = scalar_lea.sflag [#allocation3], %s121
          %s123 = sand.u32 %s25, 1
          %s124 = smul.addr %s123, 8
          %s125 = scalar_lea.vmem [#allocation2], %s124
          %s127 = ssub.s32 128, 128
          %128 = vsyncadd %s122, %s127
          %s129 = smul.addr %s15, 128
          %s130 = scalar_lea.hbm %s0, %s129
          %s132 = sshll.u32 %s125, 4
          %s133 = int_to_ptr.vmem [resolvable:$true] %s132
          %135 = dma.hbm_to_vmem [thread:$0]  %s130, 128, %s133, %s122
        $region24: #{tpu_custom_call.1} parent=19 // pred_fallthru
          _
      $region20: #{tpu_custom_call.1} parent=5 // pred_fallthru
        _
      %p136 = scmp.le.s32.totalorder 1, %s15
      %p137 = scmp.lt.s32.totalorder %s15, 4
      %p138 = pnand %p136, %p137
      %p139 = pneg %p138
      // Predicated region
      $region25: #{tpu_custom_call.1} parent=5 // pred_check
        _
      $region26: #{tpu_custom_call.1} parent=5 // pred_check_branch
        %141 = sbr.rel (%p138) target = $region28
      $region27: #{tpu_custom_call.1} parent=5 // pred_region
        %s142 = ssub.s32 %s15, 1
        %s143 = sand.u32 %s28, 1
        %s144 = scalar_lea.sflag [#allocation3], %s143
        %s145 = sand.u32 %s28, 1
        %s146 = smul.addr %s145, 8
        %s147 = scalar_lea.vmem [#allocation2], %s146
        // Predicated region
        $region29: #{tpu_custom_call.1} parent=27 // pred_check
          %p148 = pneg %p41
        $region30: #{tpu_custom_call.1} parent=27 // pred_check_branch
          %150 = sbr.rel (%p148) target = $region32
        $region31: #{tpu_custom_call.1} parent=27 // pred_region
          %151 = dma.done %s144, 128
        $region32: #{tpu_custom_call.1} parent=27 // pred_fallthru
          _
        // Predicated region
        $region33: #{tpu_custom_call.1} parent=27 // pred_check
          %p152 = pneg %p62
        $region34: #{tpu_custom_call.1} parent=27 // pred_check_branch
          %154 = sbr.rel (%p152) target = $region36
        $region35: #{tpu_custom_call.1} parent=27 // pred_region
          %155 = dma.done [#allocation6], 128
        $region36: #{tpu_custom_call.1} parent=27 // pred_fallthru
          _
        %s156 = sand.u32 %s28, 1
        %s157 = scalar_lea.sflag [#allocation3], %s156
        %s158 = sand.u32 %s28, 1
        %s159 = smul.addr %s158, 8
        %s160 = scalar_lea.vmem [#allocation2], %s159
        %p161 = pneg %p41
        %p162 = pneg %p38
        %p163 = pneg %p62
        %p164 = pneg %p59
        %p165 = pneg %p88
        %p166 = pneg %p85
        %s167 = sand.u32 %s75, 1
        %s168 = scalar_lea.sflag [#allocation4], %s167
        %s169 = sand.u32 %s75, 1
        %s170 = smul.addr %s169, 8
        %s171 = scalar_lea.vmem [#allocation7], %s170
        %v172 = vld [vmem:[%s147] sm:$0xff]
        %v173 = vld [vmem:[#allocation5] sm:$0xff]
        %v174 = vlaneseq
        %v175 = vshrl.u32 %v174, 7
        %v176 = vsub.s32 0, %v175
        %v177 = vrot.slane %v173, %v176
        %v178 = vmul.f32 %v172, %v177
        %vm179 = vcmask 490496
        %v180 = vsel %vm179, %v178, 0.0
        %181 = vadd.xlane.f32.xlu0 %v180
        %v182 = vpop.xlane.xlu0 %181
        %v183 = vlaneseq
        %v184 = vshrl.u32 %v183, 7
        %v185 = vsub.s32 1, %v184
        %v186 = vrot.slane %v173, %v185
        %v187 = vmul.f32 %v182, %v186
        %v188 = vsub.f32 %v172, %v187
        %v189 = vmul.f32 %v188, %v188
        %v190 = vlaneseq
        %v191 = vshrl.u32 %v190, 7
        %v192 = vsub.s32 2, %v191
        %v193 = vrot.slane %v173, %v192
        %v194 = vmul.f32 %v189, %v193
        %v195 = vsel %vm179, %v194, 0.0
        %196 = vadd.xlane.f32.xlu0 %v195
        %v197 = vpop.xlane.xlu0 %196
        %v198 = vadd.f32 %v197, 1e-12
        %v199 = vrsqrt.pop %v198
        %v200 = vlaneseq
        %v201 = vshrl.u32 %v200, 7
        %v202 = vsub.s32 3, %v201
        %v203 = vrot.slane %v173, %v202
        %v204 = vmul.f32 %v199, %v203
        %v205 = vmul.f32 %v188, %v204
        %v206 = vlaneseq
        %v207 = vshrl.u32 %v206, 7
        %v208 = vsub.s32 4, %v207
        %v209 = vrot.slane %v173, %v208
        %v210 = vadd.f32 %v205, %v209
        %211 = vst.msk [vmem:[%s171] sm:$0xff] %vm179, %v210
        %s212 = sand.u32 %s75, 1
        %s213 = scalar_lea.sflag [#allocation4], %s212
        %s214 = sand.u32 %s75, 1
        %s215 = smul.addr %s214, 8
        %s216 = scalar_lea.vmem [#allocation7], %s215
        // Predicated region
        $region37: #{tpu_custom_call.1} parent=27 // pred_check
          %p217 = pneg %p85
        $region38: #{tpu_custom_call.1} parent=27 // pred_check_branch
          %219 = sbr.rel (%p217) target = $region40
        $region39: #{tpu_custom_call.1} parent=27 // pred_region
          %s221 = ssub.s32 128, 128
          %222 = vsyncadd %s213, %s221
          %s223 = smul.addr %s20, 128
          %s224 = scalar_lea.hbm %s2, %s223
          %s226 = sshll.u32 %s216, 4
          %s227 = int_to_ptr.vmem [resolvable:$true] %s226
          %229 = dma.vmem_to_hbm [thread:$0]  %s227, 128, %s224, %s213
        $region40: #{tpu_custom_call.1} parent=27 // pred_fallthru
          _
      $region28: #{tpu_custom_call.1} parent=5 // pred_fallthru
        _
      %p230 = scmp.le.s32.totalorder 2, %s15
      // Predicated region
      $region41: #{tpu_custom_call.1} parent=5 // pred_check
        %p231 = pneg %p230
      $region42: #{tpu_custom_call.1} parent=5 // pred_check_branch
        %233 = sbr.rel (%p231) target = $region44
      $region43: #{tpu_custom_call.1} parent=5 // pred_region
        %s234 = ssub.s32 %s15, 2
        // Predicated region
        $region45: #{tpu_custom_call.1} parent=43 // pred_check
          %p235 = pneg %p91
        $region46: #{tpu_custom_call.1} parent=43 // pred_check_branch
          %237 = sbr.rel (%p235) target = $region48
        $region47: #{tpu_custom_call.1} parent=43 // pred_region
          %s238 = sand.u32 %s76, 1
          %s239 = scalar_lea.sflag [#allocation4], %s238
          %s240 = sand.u32 %s76, 1
          %s241 = smul.addr %s240, 8
          %s242 = scalar_lea.vmem [#allocation7], %s241
          %243 = dma.done %s239, 128
        $region48: #{tpu_custom_call.1} parent=43 // pred_fallthru
          _
      $region44: #{tpu_custom_call.1} parent=5 // pred_fallthru
        _
    $region6: #{tpu_custom_call.1} parent=1 // loop_footer
      %s19 = sadd.s32 1, %s15
    $region7: #{tpu_custom_call.1} parent=1 // loop_footer_branch
      %14 = sbr.rel target = $region3
    $region8: #{tpu_custom_call.1} parent=1 // loop_exit
      _
    %244 = vsyncpa [#allocation3], 1
    %s245 = scalar_lea.sflag [#allocation3], 1
    %246 = vsyncpa %s245, 1
    %247 = vsyncpa [#allocation6], 1
    %248 = vsyncpa [#allocation4], 1
    %s249 = scalar_lea.sflag [#allocation4], 1
    %250 = vsyncpa %s249, 1

</llo_original>
